<compile_context>
chip_gen: v5e
topology: v5e:2x2
jax: 0.10.0
libtpu: 0.0.40
codegen_flags: <defaults>
</compile_context>

<pallas_src>
import functools

import jax
import jax.numpy as jnp
from jax.experimental import pallas as pl
from jax.experimental.pallas import tpu as pltpu


def _focal_loss_kernel(x_ref, t_ref, out_ref, *,
                       gamma, n_rows, block_rows, needs_mask):
    x = x_ref[...].astype(jnp.float32)
    t = t_ref[...].astype(jnp.float32)
    c = x.shape[-1]

    # Numerically-stable log_softmax over the class (lane) axis.
    m = jnp.max(x, axis=-1, keepdims=True)
    lse = jnp.log(jnp.sum(jnp.exp(x - m), axis=-1, keepdims=True))
    logpt = (x - m - lse) + t                     # log_softmax(input) + target

    # Trace-time specialization of gamma: gamma == 0 skips exp + pow entirely;
    # small integer gamma uses repeated multiplies (no transcendental pow).
    if gamma == 0.0:
        loss = -logpt
    else:
        pt = jnp.exp(logpt)
        one_minus_pt = jnp.float32(1.0) - pt
        if float(gamma).is_integer() and 0.0 < gamma <= 8.0:
            w = one_minus_pt
            for _ in range(int(gamma) - 1):
                w = w * one_minus_pt
        else:
            w = one_minus_pt ** jnp.float32(gamma)
        loss = -w * logpt

    # Zero out rows past the true row count in the (padded) last block.
    if needs_mask:
        i = pl.program_id(0)
        rows = jax.lax.broadcasted_iota(jnp.int32, loss.shape, 0) + i * block_rows
        loss = jnp.where(rows < n_rows, loss, jnp.float32(0.0))

    # Reduce only over row-groups here (cheap VPU adds); the expensive
    # cross-lane reduction to a scalar happens exactly once, outside the kernel.
    partial = jnp.sum(loss.reshape(block_rows // 8, 8, c), axis=0)   # (8, C)
    out_ref[...] = partial[None]


def _pick_block_rows(n, c, dtype, vmem_budget_bytes=16 * 1024 * 1024):
    """Largest row-tile keeping 2 inputs x 2 pipeline buffers within budget."""
    itemsize = jnp.dtype(dtype).itemsize
    per_row = 2 * 2 * c * itemsize            # 2 inputs, double-buffered
    br = max(8, min(2048, vmem_budget_bytes // max(per_row, 1)))
    align = 8 if itemsize >= 4 else (16 if itemsize == 2 else 32)
    br = max(align, (br // align) * align)
    n_pad = -(-n // align) * align            # round n up to sublane alignment
    return max(align, min(br, n_pad))


def focal_loss(x, target, *, gamma=0.0, size_average=True, block_rows=None):
    """Pallas TPU implementation of FocalLoss.forward (alpha=None path)."""
    # TODO(synk): the alpha branch (integer gather of alpha with target indices)
    # is skipped — it is inconsistent with the element-wise `logpt + target`
    # above and the module default is alpha=None.
    n, c = x.shape
    assert target.shape == (n, c)

    if block_rows is None:
        block_rows = _pick_block_rows(n, c, x.dtype)
    block_rows = max(8, (int(block_rows) // 8) * 8)

    num_blocks = pl.cdiv(n, block_rows)
    needs_mask = (n % block_rows) != 0

    kernel = functools.partial(
        _focal_loss_kernel,
        gamma=float(gamma),
        n_rows=n,
        block_rows=block_rows,
        needs_mask=needs_mask,
    )

    partials = pl.pallas_call(
        kernel,
        out_shape=jax.ShapeDtypeStruct((num_blocks, 8, c), jnp.float32),
        grid=(num_blocks,),
        in_specs=[
            pl.BlockSpec((block_rows, c), lambda i: (i, 0)),
            pl.BlockSpec((block_rows, c), lambda i: (i, 0)),
        ],
        out_specs=pl.BlockSpec((1, 8, c), lambda i: (i, 0, 0)),
        compiler_params=pltpu.CompilerParams(
            dimension_semantics=("parallel",),        # independent per-block
            vmem_limit_bytes=32 * 1024 * 1024,        # explicit (v5e default=16MiB)
        ),
    )(x, target)

    total = jnp.sum(partials)
    if size_average:
        total = total / jnp.float32(n * c)
    return total


def focal_loss_ref(x, target, *, gamma=0.0, size_average=True):
    """Pure-JAX reference mirroring the PyTorch forward."""
    logpt = jax.nn.log_softmax(x.astype(jnp.float32), axis=1) + target.astype(jnp.float32)
    logpt = logpt.reshape(-1)
    pt = jnp.exp(logpt)
    loss = -((1.0 - pt) ** gamma) * logpt
    return loss.mean() if size_average else loss.sum()


if __name__ == "__main__":
    key = jax.random.PRNGKey(0)
    kx, kt = jax.random.split(key)

    # Module defaults: gamma=0, alpha=None, size_average=True.
    gamma = 0.0

    # Case 1: ragged row count (exercises cdiv grid + in-kernel row mask).
    N1, C = 20, 128
    x1 = jax.random.normal(kx, (N1, C), dtype=jnp.float32)
    t1 = jax.random.normal(kt, (N1, C), dtype=jnp.float32)
    out1 = jax.block_until_ready(focal_loss(x1, t1, gamma=gamma, size_average=True))
    ref1 = focal_loss_ref(x1, t1, gamma=gamma, size_average=True)
    assert jnp.allclose(out1, ref1, rtol=1e-5, atol=1e-5), (out1, ref1)

    # Case 2: multi-block "parallel" grid with a ragged tail, size_average=False.
    N2 = 40
    x2 = jax.random.normal(kx, (N2, C), dtype=jnp.float32)
    t2 = jax.random.normal(kt, (N2, C), dtype=jnp.float32)
    out2 = jax.block_until_ready(
        focal_loss(x2, t2, gamma=gamma, size_average=False, block_rows=16))
    ref2 = focal_loss_ref(x2, t2, gamma=gamma, size_average=False)
    assert jnp.allclose(out2, ref2, rtol=1e-5, atol=1e-4), (out2, ref2)

    print("KERNEL_OK")
</pallas_src>

<mosaic_0001>
module attributes {stable_mosaic.version = 11 : i64} {
  func.func @_focal_loss_kernel(%arg0: i32, %arg1: memref<24x128xf32, #tpu.memory_space<vmem>>, %arg2: memref<24x128xf32, #tpu.memory_space<vmem>>, %arg3: memref<1x8x128xf32, #tpu.memory_space<vmem>>) attributes {dimension_semantics = [#tpu.dimension_semantics<parallel>], iteration_bounds = array<i64: 1>, scalar_prefetch = 0 : i64, scratch_operands = 0 : i64, tpu.core_type = #tpu.core_type<tc>, window_params = [{transform_indices = @transform_0, window_bounds = array<i64: 24, 128>}, {transform_indices = @transform_1, window_bounds = array<i64: 24, 128>}, {transform_indices = @transform_2, window_bounds = array<i64: 1, 8, 128>}]} {
    %c0 = arith.constant 0 : index
    %c0_0 = arith.constant 0 : index
    %0 = vector.load %arg1[%c0, %c0_0] : memref<24x128xf32, #tpu.memory_space<vmem>>, vector<24x128xf32>
    %c0_1 = arith.constant 0 : index
    %c0_2 = arith.constant 0 : index
    %1 = vector.load %arg2[%c0_1, %c0_2] : memref<24x128xf32, #tpu.memory_space<vmem>>, vector<24x128xf32>
    %cst = arith.constant dense<0xFF800000> : vector<24xf32>
    %2 = vector.multi_reduction <maximumf>, %0, %cst [1] : vector<24x128xf32> to vector<24xf32>
    %3 = vector.shape_cast %2 : vector<24xf32> to vector<24x1xf32>
    %4 = vector.broadcast %3 : vector<24x1xf32> to vector<24x128xf32>
    %5 = arith.subf %0, %4 : vector<24x128xf32>
    %6 = math.exp %5 : vector<24x128xf32>
    %cst_3 = arith.constant dense<0.000000e+00> : vector<24xf32>
    %7 = vector.multi_reduction <add>, %6, %cst_3 [1] : vector<24x128xf32> to vector<24xf32>
    %8 = vector.shape_cast %7 : vector<24xf32> to vector<24x1xf32>
    %9 = math.log %8 : vector<24x1xf32>
    %10 = vector.broadcast %3 : vector<24x1xf32> to vector<24x128xf32>
    %11 = arith.subf %0, %10 : vector<24x128xf32>
    %12 = vector.broadcast %9 : vector<24x1xf32> to vector<24x128xf32>
    %13 = arith.subf %11, %12 : vector<24x128xf32>
    %14 = arith.addf %13, %1 : vector<24x128xf32>
    %cst_4 = arith.constant 0.000000e+00 : f32
    %15 = vector.broadcast %cst_4 : f32 to vector<24x128xf32>
    %16 = arith.subf %15, %14 : vector<24x128xf32>
    %17 = tpu.iota {dimensions = array<i32: 0>} : vector<24x128xi32>
    %c24_i32 = arith.constant 24 : i32
    %18 = arith.muli %arg0, %c24_i32 : i32
    %19 = vector.broadcast %18 : i32 to vector<24x128xi32>
    %20 = arith.addi %17, %19 : vector<24x128xi32>
    %c20_i32 = arith.constant 20 : i32
    %21 = vector.broadcast %c20_i32 : i32 to vector<24x128xi32>
    %22 = arith.cmpi slt, %20, %21 : vector<24x128xi32>
    %cst_5 = arith.constant 0.000000e+00 : f32
    %23 = vector.broadcast %cst_5 : f32 to vector<24x128xf32>
    %24 = arith.select %22, %16, %23 : vector<24x128xi1>, vector<24x128xf32>
    %25 = vector.shape_cast %24 : vector<24x128xf32> to vector<3x8x128xf32>
    %cst_6 = arith.constant dense<0.000000e+00> : vector<8x128xf32>
    %26 = vector.multi_reduction <add>, %25, %cst_6 [0] : vector<3x8x128xf32> to vector<8x128xf32>
    %27 = vector.shape_cast %26 : vector<8x128xf32> to vector<1x8x128xf32>
    %c0_7 = arith.constant 0 : index
    %c0_8 = arith.constant 0 : index
    %c0_9 = arith.constant 0 : index
    %28 = vector.load %arg3[%c0_7, %c0_8, %c0_9] : memref<1x8x128xf32, #tpu.memory_space<vmem>>, vector<1x8x128xf32>
    tpu.vector_store %arg3[%c0_7, %c0_8, %c0_9], %27 {strides = array<i32>} : memref<1x8x128xf32, #tpu.memory_space<vmem>>, vector<1x8x128xf32>,
    return
  }
  func.func @transform_0(%arg0: i32) -> (i32, i32) {
    %c0_i32 = arith.constant 0 : i32
    %c0_i32_0 = arith.constant 0 : i32
    return %arg0, %c0_i32 : i32, i32
  }
  func.func @transform_1(%arg0: i32) -> (i32, i32) {
    %c0_i32 = arith.constant 0 : i32
    %c0_i32_0 = arith.constant 0 : i32
    return %arg0, %c0_i32 : i32, i32
  }
  func.func @transform_2(%arg0: i32) -> (i32, i32, i32) {
    %c0_i32 = arith.constant 0 : i32
    %c0_i32_0 = arith.constant 0 : i32
    %c0_i32_1 = arith.constant 0 : i32
    return %arg0, %c0_i32, %c0_i32_0 : i32, i32, i32
  }
}

</mosaic_0001>

<llo_original>
// kernel: tpu_custom_call.1
$region0: #{tpu_custom_call.1}
  #allocation0 [shape = 'u32[]', space=smem, size = 0x4, offset = 0x4, fixed_abs, tag = 'smem constant byte address 0x4 - core index']
  #allocation1 [shape = 'u32[72,128]{1,0:T(1,128)}', space=vmem, size = 0x9000, scoped, tag = 'internal scratch']
  %s0 = inlined_call_operand.hbm [shape: f32[20,128], index: 0, kind: input, shape index: {}]
  %s1 = inlined_call_operand.hbm [shape: f32[20,128], index: 1, kind: input, shape index: {}]
  %s2 = inlined_call_operand.hbm [shape: f32[1,8,128], index: 2, kind: output, shape index: {}]
  %s3 = sld [smem:[#allocation0]]
  $region26: #{tpu_custom_call.1} parent=0
    _
  %s5 = ssub.s32 1, %s3
  %s6 = scalar_select 0, %s5, %s3
  $region1: #{tpu_custom_call.1} parent=0
    #allocation2 [shape = 'u8[12288]{0}', space=vmem, size = 0x3000, scoped, tag = 'input window, operand 0, single buffered']
    #allocation3 [shape = 's32[1]{0}', space=sflag, size = 0x4, scoped, tag = 'scoped memory for tpu_custom_call.1']
    #allocation4 [shape = 's32[1]{0}', space=sflag, size = 0x4, scoped, tag = 'scoped memory for tpu_custom_call.1']
    #allocation5 [shape = 'u8[12288]{0}', space=vmem, size = 0x3000, scoped, tag = 'input window, operand 1, single buffered']
    #allocation6 [shape = 's32[1]{0}', space=sflag, size = 0x4, scoped, tag = 'scoped memory for tpu_custom_call.1']
    #allocation7 [shape = 'u8[4096]{0}', space=vmem, size = 0x1000, scoped, tag = 'output window, operand 0, single buffered']
    %7 = vsyncpa [#allocation3], 0
    %8 = vsyncpa [#allocation6], 0
    %9 = vsyncpa [#allocation4], 0
    // Predicated region
    $region2: #{tpu_custom_call.1} parent=1 // pred_check
      _
    $region3: #{tpu_custom_call.1} parent=1 // pred_check_branch
      %11 = sbr.rel (0) target = $region5
    $region4: #{tpu_custom_call.1} parent=1 // pred_region
      %13 = vsyncadd [#allocation3], 0
      %s14 = sshll.u32 %s0, 4
      %s15 = int_to_ptr.hbm [resolvable:$true] %s14
      %s16 = sshll.u32 [#allocation2], 4
      %s17 = int_to_ptr.vmem [resolvable:$true] %s16
      %22 = dma.hbm_to_vmem [thread:$0]  %s15, 384, %s17, [#allocation3], 128, 128, 8
    $region5: #{tpu_custom_call.1} parent=1 // pred_fallthru
      _
    // Predicated region
    $region6: #{tpu_custom_call.1} parent=1 // pred_check
      _
    $region7: #{tpu_custom_call.1} parent=1 // pred_check_branch
      %24 = sbr.rel (0) target = $region9
    $region8: #{tpu_custom_call.1} parent=1 // pred_region
      %26 = vsyncadd [#allocation6], 0
      %s27 = sshll.u32 %s1, 4
      %s28 = int_to_ptr.hbm [resolvable:$true] %s27
      %s29 = sshll.u32 [#allocation5], 4
      %s30 = int_to_ptr.vmem [resolvable:$true] %s29
      %35 = dma.hbm_to_vmem [thread:$0]  %s28, 384, %s30, [#allocation6], 128, 128, 8
    $region9: #{tpu_custom_call.1} parent=1 // pred_fallthru
      _
    // Predicated region
    $region10: #{tpu_custom_call.1} parent=1 // pred_check
      _
    $region11: #{tpu_custom_call.1} parent=1 // pred_check_branch
      %37 = sbr.rel (0) target = $region13
    $region12: #{tpu_custom_call.1} parent=1 // pred_region
      %39 = dma.done [#allocation3], 384
    $region13: #{tpu_custom_call.1} parent=1 // pred_fallthru
      _
    // Predicated region
    $region14: #{tpu_custom_call.1} parent=1 // pred_check
      _
    $region15: #{tpu_custom_call.1} parent=1 // pred_check_branch
      %41 = sbr.rel (0) target = $region17
    $region16: #{tpu_custom_call.1} parent=1 // pred_region
      %43 = dma.done [#allocation6], 384
    $region17: #{tpu_custom_call.1} parent=1 // pred_fallthru
      _
    %v44 = vld [vmem:[#allocation2] sm:$0xff]
    %v45 = vld [vmem:[#allocation2 + $0x8] sm:$0xff]
    %v46 = vld [vmem:[#allocation2 + $0x10] sm:$0xff]
    %v47 = vld [vmem:[#allocation5] sm:$0xff]
    %v48 = vld [vmem:[#allocation5 + $0x8] sm:$0xff]
    %v49 = vld [vmem:[#allocation5 + $0x10] sm:$0xff]
    %50 = vmax.xlane.f32.xlu0 %v44
    %v51 = vpop.xlane.xlu0 %50
    %52 = vmax.xlane.f32.xlu0 %v45
    %v53 = vpop.xlane.xlu0 %52
    %54 = vmax.xlane.f32.xlu0 %v46
    %v55 = vpop.xlane.xlu0 %54
    %v56 = vsub.f32 %v44, %v51
    %v57 = vsub.f32 %v45, %v53
    %v58 = vsub.f32 %v46, %v55
    %v59 = vmul.f32 %v56, 1.442695
    %v60 = vpow.pop %v59
    %v61 = vmul.f32 %v57, 1.442695
    %v62 = vpow.pop %v61
    %v63 = vmul.f32 %v58, 1.442695
    %v64 = vpow.pop %v63
    %65 = vadd.xlane.f32.xlu0 %v60
    %v66 = vpop.xlane.xlu0 %65
    %67 = vadd.xlane.f32.xlu0 %v62
    %v68 = vpop.xlane.xlu0 %67
    %69 = vadd.xlane.f32.xlu0 %v64
    %v70 = vpop.xlane.xlu0 %69
    %v71 = vlog2.pop %v66
    %v72 = vmul.f32 %v71, 0.6931472
    %v73 = vlog2.pop %v68
    %v74 = vmul.f32 %v73, 0.6931472
    %v75 = vlog2.pop %v70
    %v76 = vmul.f32 %v75, 0.6931472
    %v77 = vsub.f32 %v56, %v72
    %v78 = vsub.f32 %v57, %v74
    %v79 = vsub.f32 %v58, %v76
    %v80 = vadd.f32 %v77, %v47
    %v81 = vadd.f32 %v78, %v48
    %v82 = vadd.f32 %v79, %v49
    %v83 = vsub.f32 0.0, %v80
    %v84 = vsub.f32 0.0, %v81
    %v85 = vsub.f32 0.0, %v82
    %v86 = vlaneseq
    %v87 = vshrl.u32 %v86, 7
    %v88 = vadd.s32 %v87, 8
    %v89 = vadd.s32 %v87, 16
    %s90 = smul.u32 0, 24
    %v91 = vstv %s90
    %v92 = vadd.s32 %v87, %v91
    %v93 = vadd.s32 %v88, %v91
    %v94 = vadd.s32 %v89, %v91
    %vm95 = vcmp.lt.s32.totalorder %v92, 20
    %vm96 = vcmp.lt.s32.totalorder %v93, 20
    %vm97 = vcmp.lt.s32.totalorder %v94, 20
    %v98 = vsel %vm95, %v83, 0.0
    %v99 = vsel %vm96, %v84, 0.0
    %v100 = vsel %vm97, %v85, 0.0
    %v101 = vadd.f32 %v98, %v99
    %v102 = vadd.f32 %v101, %v100
    %103 = vst [vmem:[#allocation7] sm:$0xff] %v102
    // Predicated region
    $region18: #{tpu_custom_call.1} parent=1 // pred_check
      _
    $region19: #{tpu_custom_call.1} parent=1 // pred_check_branch
      %105 = sbr.rel (0) target = $region21
    $region20: #{tpu_custom_call.1} parent=1 // pred_region
      %107 = vsyncadd [#allocation4], 0
      %s109 = sshll.u32 [#allocation7], 4
      %s110 = int_to_ptr.vmem [resolvable:$true] %s109
      %s111 = sshll.u32 %s2, 4
      %s112 = int_to_ptr.hbm [resolvable:$true] %s111
      %114 = dma.vmem_to_hbm [thread:$0]  %s110, 128, %s112, [#allocation4]
    $region21: #{tpu_custom_call.1} parent=1 // pred_fallthru
      _
    // Predicated region
    $region22: #{tpu_custom_call.1} parent=1 // pred_check
      _
    $region23: #{tpu_custom_call.1} parent=1 // pred_check_branch
      %116 = sbr.rel (0) target = $region25
    $region24: #{tpu_custom_call.1} parent=1 // pred_region
      %118 = dma.done [#allocation4], 128
    $region25: #{tpu_custom_call.1} parent=1 // pred_fallthru
      _
    %119 = vsyncpa [#allocation3], 1
    %120 = vsyncpa [#allocation6], 1
    %121 = vsyncpa [#allocation4], 1

</llo_original>
